<compile_context>
chip_gen: v7x
topology: tpu7x:2x2x1
jax: 0.10.0
libtpu: 0.0.40
codegen_flags: <defaults>
</compile_context>

<pallas_src>
import math

import jax
import jax.numpy as jnp
import numpy as np
from jax.experimental import pallas as pl
from jax.experimental.pallas import tpu as pltpu

EPS = 1e-5
LANE = 128


def _round_up(v, m):
    return ((v + m - 1) // m) * m


# --------------------------------------------------------------------------
# K1: per-tile partial channel statistics (sum, sum of squares) of bf16 x.
# Rows 0/1 of each 8-row output group hold sum / sumsq; reduced in XLA glue.
# Each tile writes its own output block, so the grid axis stays "parallel".
# --------------------------------------------------------------------------
def _partial_channel_stats(x_pad, tm):
    m_pad, c = x_pad.shape
    n_tiles = m_pad // tm

    def kernel(x_ref, st_ref):
        x = x_ref[...].astype(jnp.float32)          # stats math stays f32
        st_ref[0:1, :] = jnp.sum(x, axis=0, keepdims=True)
        st_ref[1:2, :] = jnp.sum(x * x, axis=0, keepdims=True)
        st_ref[2:8, :] = jnp.zeros((6, c), jnp.float32)

    out = pl.pallas_call(
        kernel,
        out_shape=jax.ShapeDtypeStruct((n_tiles * 8, c), jnp.float32),
        grid=(n_tiles,),
        in_specs=[pl.BlockSpec((tm, c), lambda i: (i, 0))],
        out_specs=pl.BlockSpec((8, c), lambda i: (i, 0)),
        compiler_params=pltpu.CompilerParams(
            dimension_semantics=("parallel",)),
    )(x_pad)
    out = out.reshape(n_tiles, 8, c)
    return jnp.sum(out[:, 0, :], axis=0), jnp.sum(out[:, 1, :], axis=0)


# --------------------------------------------------------------------------
# K2: fused bn1 -> relu -> conv1 (1x1) + partial bn2 stats of the conv output.
# No in-kernel row mask: padded rows contribute a constant h_pad row that is
# subtracted from the statistics in the wrapper.
# --------------------------------------------------------------------------
def _stage1(x_pad, scale1, shift1, w1_bf16, tm):
    m_pad, cin = x_pad.shape
    cp = w1_bf16.shape[1]
    n_tiles = m_pad // tm

    def kernel(x_ref, sc_ref, sh_ref, w_ref, h_ref, st_ref):
        xf = x_ref[...].astype(jnp.float32)                     # bf16 -> f32
        y = jnp.maximum(xf * sc_ref[...] + sh_ref[...], 0.0)
        h = jnp.dot(y.astype(jnp.bfloat16), w_ref[...],
                    preferred_element_type=jnp.float32)
        h_ref[...] = h.astype(jnp.bfloat16)
        st_ref[0:1, :] = jnp.sum(h, axis=0, keepdims=True)
        st_ref[1:2, :] = jnp.sum(h * h, axis=0, keepdims=True)
        st_ref[2:8, :] = jnp.zeros((6, cp), jnp.float32)

    h, st = pl.pallas_call(
        kernel,
        out_shape=(jax.ShapeDtypeStruct((m_pad, cp), jnp.bfloat16),
                   jax.ShapeDtypeStruct((n_tiles * 8, cp), jnp.float32)),
        grid=(n_tiles,),
        in_specs=[pl.BlockSpec((tm, cin), lambda i: (i, 0)),
                  pl.BlockSpec((1, cin), lambda i: (0, 0)),
                  pl.BlockSpec((1, cin), lambda i: (0, 0)),
                  pl.BlockSpec((cin, cp), lambda i: (0, 0))],
        out_specs=(pl.BlockSpec((tm, cp), lambda i: (i, 0)),
                   pl.BlockSpec((8, cp), lambda i: (i, 0))),
        compiler_params=pltpu.CompilerParams(
            dimension_semantics=("parallel",)),
    )(x_pad, scale1, shift1, w1_bf16)
    st = st.reshape(n_tiles, 8, cp)
    return h, jnp.sum(st[:, 0, :], axis=0), jnp.sum(st[:, 1, :], axis=0)


# --------------------------------------------------------------------------
# K3: fused bn2 -> relu -> 3x3 conv (padding=1), one image per grid step.
# The 3x3 conv is 9 shifted (HW, Cp) x (Cp, G) matmuls read from a flat,
# zero-padded VMEM staging buffer; horizontal edge wrap is handled by two
# column-masked copies of the staged image (not per-tap mask multiplies).
# --------------------------------------------------------------------------
def _stage2_conv3x3(h3, scale2, shift2, w_taps, mask_w, mask_e, w_img):
    n, hw, cp = h3.shape
    growth = w_taps.shape[2]
    pad = _round_up(w_img + 1, 8)        # 8-aligned halo -> kx==1 tap windows
    pad_rows = hw + 2 * pad              # start on sublane boundaries

    def kernel(sc_ref, sh_ref, wm_ref, em_ref, h_ref, w_ref, o_ref, buf_ref):
        # Zero halo rows every step: the grid axis is "parallel", so a
        # program_id==0 hoist would never execute on the second TensorCore of
        # a megacore chip; these extra stores are a few % of the step's writes.
        zhalo = jnp.zeros((3, pad, cp), jnp.bfloat16)
        buf_ref[:, 0:pad, :] = zhalo
        buf_ref[:, pad + hw:pad_rows, :] = zhalo

        # bn2 -> relu in f32, then stage three bf16 copies:
        #   buf[0]: unmasked          (center taps, kx == 1)
        #   buf[1]: column W-1 zeroed (west taps,   kx == 0)
        #   buf[2]: column 0   zeroed (east taps,   kx == 2)
        b = jnp.maximum(h_ref[0].astype(jnp.float32) * sc_ref[...]
                        + sh_ref[...], 0.0)
        buf_ref[0, pad:pad + hw, :] = b.astype(jnp.bfloat16)
        buf_ref[1, pad:pad + hw, :] = (b * wm_ref[...]).astype(jnp.bfloat16)
        buf_ref[2, pad:pad + hw, :] = (b * em_ref[...]).astype(jnp.bfloat16)

        # 9 shifted matmuls accumulated into the VMEM output block
        # (back-to-back dots into one destination ref).
        o_ref[0] = jnp.zeros((hw, growth), jnp.float32)
        for ky in range(3):
            for kx in range(3):
                start = pad + (ky - 1) * w_img + (kx - 1)
                src = 1 if kx == 0 else (2 if kx == 2 else 0)
                win = buf_ref[src, start:start + hw, :]
                o_ref[0] += jnp.dot(win, w_ref[ky * 3 + kx],
                                    preferred_element_type=jnp.float32)

    return pl.pallas_call(
        kernel,
        out_shape=jax.ShapeDtypeStruct((n, hw, growth), jnp.float32),
        grid=(n,),
        in_specs=[pl.BlockSpec((1, cp), lambda i: (0, 0)),
                  pl.BlockSpec((1, cp), lambda i: (0, 0)),
                  pl.BlockSpec((hw, 1), lambda i: (0, 0)),
                  pl.BlockSpec((hw, 1), lambda i: (0, 0)),
                  pl.BlockSpec((1, hw, cp), lambda i: (i, 0, 0)),
                  pl.BlockSpec((9, cp, growth), lambda i: (0, 0, 0))],
        out_specs=pl.BlockSpec((1, hw, growth), lambda i: (i, 0, 0)),
        scratch_shapes=[pltpu.VMEM((3, pad_rows, cp), jnp.bfloat16)],
        compiler_params=pltpu.CompilerParams(
            dimension_semantics=("parallel",)),
    )(scale2, shift2, mask_w, mask_e, h3, w_taps)


# ----------------------------- forward -------------------------------------
def bottleneck_forward(x_nchw, params):
    n, cin, h_img, w_img = x_nchw.shape
    growth = params["conv2_w"].shape[0]
    cmid = params["conv1_w"].shape[0]                  # 4 * growth
    cp = _round_up(cmid, LANE)                         # lane-dense conv1 out

    x_nchw = x_nchw.astype(jnp.float32)
    hw = h_img * w_img
    m = n * hw

    # Kernels read x in bf16 (halves HBM-bound x traffic); the final concat
    # reuses the original f32 NCHW x, so the passthrough channels stay exact.
    # TODO(synk): fuse the NCHW->NHWC transpose + bf16 cast + K1 stats into a
    # single Pallas kernel to drop one more full pass over x.
    x_flat = jnp.transpose(x_nchw, (0, 2, 3, 1)).astype(
        jnp.bfloat16).reshape(m, cin)

    # Row tiling: large tiles amortize the ~0.35us per-grid-step overhead;
    # with bf16 x a 2048-row tile stays well inside the default scoped-VMEM
    # limits on v5e/v6e/v7x even for large DenseNet channel counts.
    tm = 2048 if m >= 2048 else _round_up(m, 8)
    m_pad = _round_up(m, tm)
    x_pad = jnp.pad(x_flat, ((0, m_pad - m), (0, 0))) if m_pad != m else x_flat

    # ---- bn1 statistics (zero-padded rows contribute nothing) ----
    # One-pass E[x^2] - mean^2 (biased, training-mode), clamped at 0.
    s1, ss1 = _partial_channel_stats(x_pad, tm)
    mean1 = s1 / m
    var1 = jnp.maximum(ss1 / m - mean1 * mean1, 0.0)
    scale1 = params["gamma1"] / jnp.sqrt(var1 + EPS)
    shift1 = params["beta1"] - mean1 * scale1

    # ---- stage 1: bn1 -> relu -> conv1 (1x1), fused bn2 partial stats ----
    w1 = jnp.transpose(params["conv1_w"][:, :, 0, 0], (1, 0))     # (Cin, Cmid)
    w1p = jnp.zeros((cin, cp), jnp.float32).at[:, :cmid].set(w1)
    w1p_bf16 = w1p.astype(jnp.bfloat16)
    h_bf16, s2, ss2 = _stage1(x_pad,
                              scale1[None].astype(jnp.float32),
                              shift1[None].astype(jnp.float32),
                              w1p_bf16, tm)

    # Padded rows (x == 0) produce a constant h_pad = relu(shift1) @ w1 row in
    # the bn2 statistics; subtract it here instead of masking in the kernel.
    if m_pad != m:
        y_pad = jnp.maximum(shift1, 0.0).astype(jnp.bfloat16)[None, :]
        h_padrow = jnp.dot(y_pad, w1p_bf16,
                           preferred_element_type=jnp.float32)[0]
        npad = float(m_pad - m)
        s2 = s2 - npad * h_padrow
        ss2 = ss2 - npad * h_padrow * h_padrow

    mean2 = s2 / m
    var2 = jnp.maximum(ss2 / m - mean2 * mean2, 0.0)
    gamma2 = jnp.zeros((cp,), jnp.float32).at[:cmid].set(params["gamma2"])
    beta2 = jnp.zeros((cp,), jnp.float32).at[:cmid].set(params["beta2"])
    scale2 = gamma2 / jnp.sqrt(var2 + EPS)             # padded channels -> 0
    shift2 = beta2 - mean2 * scale2

    # ---- stage 2: bn2 -> relu -> conv2 (3x3, pad=1) ----
    h3 = h_bf16[:m].reshape(n, hw, cp)
    w2 = jnp.transpose(params["conv2_w"], (2, 3, 1, 0)).reshape(9, cmid, growth)
    w2p = jnp.zeros((9, cp, growth), jnp.float32).at[:, :cmid, :].set(w2)
    col = jnp.tile(jnp.arange(w_img, dtype=jnp.int32), h_img)
    mask_w = (col < w_img - 1).astype(jnp.float32)[:, None]   # zero last col
    mask_e = (col > 0).astype(jnp.float32)[:, None]           # zero first col
    out3 = _stage2_conv3x3(h3, scale2[None], shift2[None],
                           w2p.astype(jnp.bfloat16), mask_w, mask_e, w_img)

    # cat([conv2_out, x], channel) directly in NCHW: only the growth channels
    # go through a layout transform; x is concatenated untouched.
    out_nchw = jnp.transpose(out3.reshape(n, h_img, w_img, growth),
                             (0, 3, 1, 2))
    return jnp.concatenate([out_nchw, x_nchw], axis=1)


# ----------------------------- pure-JAX reference --------------------------
def ref_forward(x, params):
    def bn(h, gamma, beta):
        mean = h.mean(axis=(0, 2, 3), keepdims=True)
        var = ((h - mean) ** 2).mean(axis=(0, 2, 3), keepdims=True)
        return (gamma[None, :, None, None] * (h - mean) / jnp.sqrt(var + EPS)
                + beta[None, :, None, None])

    h = jnp.maximum(bn(x, params["gamma1"], params["beta1"]), 0.0)
    h = jax.lax.conv_general_dilated(h, params["conv1_w"], (1, 1), "VALID",
                                     dimension_numbers=("NCHW", "OIHW", "NCHW"))
    h = jnp.maximum(bn(h, params["gamma2"], params["beta2"]), 0.0)
    h = jax.lax.conv_general_dilated(h, params["conv2_w"], (1, 1),
                                     ((1, 1), (1, 1)),
                                     dimension_numbers=("NCHW", "OIHW", "NCHW"))
    return jnp.concatenate([h, x], axis=1)


# ----------------------------- main ----------------------------------------
if __name__ == "__main__":
    N, in_planes, H, W = 2, 4, 16, 16
    growth_rate = 4
    key = jax.random.PRNGKey(0)
    ks = jax.random.split(key, 7)

    x = jax.random.normal(ks[0], (N, in_planes, H, W), jnp.float32)
    params = {
        "gamma1": 1.0 + 0.1 * jax.random.normal(ks[1], (in_planes,), jnp.float32),
        "beta1": 0.1 * jax.random.normal(ks[2], (in_planes,), jnp.float32),
        "conv1_w": jax.random.normal(ks[3], (4 * growth_rate, in_planes, 1, 1),
                                     jnp.float32) / math.sqrt(in_planes),
        "gamma2": 1.0 + 0.1 * jax.random.normal(ks[4], (4 * growth_rate,), jnp.float32),
        "beta2": 0.1 * jax.random.normal(ks[5], (4 * growth_rate,), jnp.float32),
        "conv2_w": jax.random.normal(ks[6], (growth_rate, 4 * growth_rate, 3, 3),
                                     jnp.float32) / math.sqrt(9 * 4 * growth_rate),
    }

    out = jax.block_until_ready(bottleneck_forward(x, params))
    assert out.shape == (N, growth_rate + in_planes, H, W)

    ref = jax.block_until_ready(ref_forward(x, params))
    # Tolerance reflects bf16 activations/weights on the MXU (f32 accumulation)
    # and bf16-rounded x feeding the BN statistics; plumbing bugs in the
    # conv/BN/halo logic would produce O(1) errors, far outside these bounds.
    np.testing.assert_allclose(np.asarray(out), np.asarray(ref),
                               rtol=4e-2, atol=8e-2)

    print("KERNEL_OK")
</pallas_src>

<mosaic_0001>
module attributes {stable_mosaic.version = 11 : i64} {
  func.func @kernel(%arg0: i32, %arg1: memref<512x4xbf16, #tpu.memory_space<vmem>>, %arg2: memref<8x4xf32, #tpu.memory_space<vmem>>) attributes {dimension_semantics = [#tpu.dimension_semantics<parallel>], iteration_bounds = array<i64: 1>, scalar_prefetch = 0 : i64, scratch_operands = 0 : i64, tpu.core_type = #tpu.core_type<tc>, window_params = [{transform_indices = @transform_0, window_bounds = array<i64: 512, 4>}, {transform_indices = @transform_1, window_bounds = array<i64: 8, 4>}]} {
    %c0 = arith.constant 0 : index
    %c0_0 = arith.constant 0 : index
    %0 = vector.load %arg1[%c0, %c0_0] : memref<512x4xbf16, #tpu.memory_space<vmem>>, vector<512x4xbf16>
    %1 = arith.extf %0 : vector<512x4xbf16> to vector<512x4xf32>
    %cst = arith.constant dense<0.000000e+00> : vector<4xf32>
    %2 = vector.multi_reduction <add>, %1, %cst [0] : vector<512x4xf32> to vector<4xf32>
    %3 = vector.shape_cast %2 : vector<4xf32> to vector<1x4xf32>
    %c0_1 = arith.constant 0 : index
    %c0_2 = arith.constant 0 : index
    %4 = vector.load %arg2[%c0_1, %c0_2] : memref<8x4xf32, #tpu.memory_space<vmem>>, vector<1x4xf32>
    tpu.vector_store %arg2[%c0_1, %c0_2], %3 {strides = array<i32>} : memref<8x4xf32, #tpu.memory_space<vmem>>, vector<1x4xf32>,
    %5 = arith.mulf %1, %1 : vector<512x4xf32>
    %cst_3 = arith.constant dense<0.000000e+00> : vector<4xf32>
    %6 = vector.multi_reduction <add>, %5, %cst_3 [0] : vector<512x4xf32> to vector<4xf32>
    %7 = vector.shape_cast %6 : vector<4xf32> to vector<1x4xf32>
    %c1 = arith.constant 1 : index
    %c0_4 = arith.constant 0 : index
    %8 = vector.load %arg2[%c1, %c0_4] : memref<8x4xf32, #tpu.memory_space<vmem>>, vector<1x4xf32>
    tpu.vector_store %arg2[%c1, %c0_4], %7 {strides = array<i32>} : memref<8x4xf32, #tpu.memory_space<vmem>>, vector<1x4xf32>,
    %cst_5 = arith.constant 0.000000e+00 : f32
    %9 = vector.broadcast %cst_5 : f32 to vector<6x4xf32>
    %c2 = arith.constant 2 : index
    %c0_6 = arith.constant 0 : index
    %10 = vector.load %arg2[%c2, %c0_6] : memref<8x4xf32, #tpu.memory_space<vmem>>, vector<6x4xf32>
    tpu.vector_store %arg2[%c2, %c0_6], %9 {strides = array<i32>} : memref<8x4xf32, #tpu.memory_space<vmem>>, vector<6x4xf32>,
    return
  }
  func.func @transform_0(%arg0: i32) -> (i32, i32) {
    %c0_i32 = arith.constant 0 : i32
    %c0_i32_0 = arith.constant 0 : i32
    return %arg0, %c0_i32 : i32, i32
  }
  func.func @transform_1(%arg0: i32) -> (i32, i32) {
    %c0_i32 = arith.constant 0 : i32
    %c0_i32_0 = arith.constant 0 : i32
    return %arg0, %c0_i32 : i32, i32
  }
}

</mosaic_0001>

<llo_original>
// kernel: tpu_custom_call.1
$region0: #{tpu_custom_call.1}
  #allocation0 [shape = 'u32[]', space=smem, size = 0x4, offset = 0x4, fixed_abs, tag = 'smem constant byte address 0x4 - core index']
  #allocation1 [shape = 'u32[144,128]{1,0:T(1,128)}', space=vmem, size = 0x12000, scoped, tag = 'internal scratch']
  %s0 = inlined_call_operand.vmem [shape: bf16[512,4], index: 0, kind: input, shape index: {}]
  %s1 = inlined_call_operand.vmem [shape: f32[8,4], index: 1, kind: output, shape index: {}]
  %s2 = sld [smem:[#allocation0]]
  $region14: #{tpu_custom_call.1} parent=0
    _
  %s4 = ssub.s32 1, %s2
  %s5 = scalar_select 0, %s4, %s2
  // Predicated region
  $region2: #{tpu_custom_call.1} parent=0 // pred_check
    _
  $region3: #{tpu_custom_call.1} parent=0 // pred_check_branch
    %7 = sbr.rel (0) target = $region5
  $region4: #{tpu_custom_call.1} parent=0 // pred_region
    _
  $region5: #{tpu_custom_call.1} parent=0 // pred_fallthru
    _
  %v8 = vld [vmem:[%s0] sm:$0xf]
  %v9 = vld [vmem:[%s0 + $0x4] sm:$0xf]
  %v10 = vld [vmem:[%s0 + $0x8] sm:$0xf]
  %v11 = vld [vmem:[%s0 + $0xc] sm:$0xf]
  %v12 = vld [vmem:[%s0 + $0x10] sm:$0xf]
  %v13 = vld [vmem:[%s0 + $0x14] sm:$0xf]
  %v14 = vld [vmem:[%s0 + $0x18] sm:$0xf]
  %v15 = vld [vmem:[%s0 + $0x1c] sm:$0xf]
  %v16 = vld [vmem:[%s0 + $0x20] sm:$0xf]
  %v17 = vld [vmem:[%s0 + $0x24] sm:$0xf]
  %v18 = vld [vmem:[%s0 + $0x28] sm:$0xf]
  %v19 = vld [vmem:[%s0 + $0x2c] sm:$0xf]
  %v20 = vld [vmem:[%s0 + $0x30] sm:$0xf]
  %v21 = vld [vmem:[%s0 + $0x34] sm:$0xf]
  %v22 = vld [vmem:[%s0 + $0x38] sm:$0xf]
  %v23 = vld [vmem:[%s0 + $0x3c] sm:$0xf]
  %v24 = vld [vmem:[%s0 + $0x40] sm:$0xf]
  %v25 = vld [vmem:[%s0 + $0x44] sm:$0xf]
  %v26 = vld [vmem:[%s0 + $0x48] sm:$0xf]
  %v27 = vld [vmem:[%s0 + $0x4c] sm:$0xf]
  %v28 = vld [vmem:[%s0 + $0x50] sm:$0xf]
  %v29 = vld [vmem:[%s0 + $0x54] sm:$0xf]
  %v30 = vld [vmem:[%s0 + $0x58] sm:$0xf]
  %v31 = vld [vmem:[%s0 + $0x5c] sm:$0xf]
  %v32 = vld [vmem:[%s0 + $0x60] sm:$0xf]
  %v33 = vld [vmem:[%s0 + $0x64] sm:$0xf]
  %v34 = vld [vmem:[%s0 + $0x68] sm:$0xf]
  %v35 = vld [vmem:[%s0 + $0x6c] sm:$0xf]
  %v36 = vld [vmem:[%s0 + $0x70] sm:$0xf]
  %v37 = vld [vmem:[%s0 + $0x74] sm:$0xf]
  %v38 = vld [vmem:[%s0 + $0x78] sm:$0xf]
  %v39 = vld [vmem:[%s0 + $0x7c] sm:$0xf]
  %v40 = vld [vmem:[%s0 + $0x80] sm:$0xf]
  %v41 = vld [vmem:[%s0 + $0x84] sm:$0xf]
  %v42 = vld [vmem:[%s0 + $0x88] sm:$0xf]
  %v43 = vld [vmem:[%s0 + $0x8c] sm:$0xf]
  %v44 = vld [vmem:[%s0 + $0x90] sm:$0xf]
  %v45 = vld [vmem:[%s0 + $0x94] sm:$0xf]
  %v46 = vld [vmem:[%s0 + $0x98] sm:$0xf]
  %v47 = vld [vmem:[%s0 + $0x9c] sm:$0xf]
  %v48 = vld [vmem:[%s0 + $0xa0] sm:$0xf]
  %v49 = vld [vmem:[%s0 + $0xa4] sm:$0xf]
  %v50 = vld [vmem:[%s0 + $0xa8] sm:$0xf]
  %v51 = vld [vmem:[%s0 + $0xac] sm:$0xf]
  %v52 = vld [vmem:[%s0 + $0xb0] sm:$0xf]
  %v53 = vld [vmem:[%s0 + $0xb4] sm:$0xf]
  %v54 = vld [vmem:[%s0 + $0xb8] sm:$0xf]
  %v55 = vld [vmem:[%s0 + $0xbc] sm:$0xf]
  %v56 = vld [vmem:[%s0 + $0xc0] sm:$0xf]
  %v57 = vld [vmem:[%s0 + $0xc4] sm:$0xf]
  %v58 = vld [vmem:[%s0 + $0xc8] sm:$0xf]
  %v59 = vld [vmem:[%s0 + $0xcc] sm:$0xf]
  %v60 = vld [vmem:[%s0 + $0xd0] sm:$0xf]
  %v61 = vld [vmem:[%s0 + $0xd4] sm:$0xf]
  %v62 = vld [vmem:[%s0 + $0xd8] sm:$0xf]
  %v63 = vld [vmem:[%s0 + $0xdc] sm:$0xf]
  %v64 = vld [vmem:[%s0 + $0xe0] sm:$0xf]
  %v65 = vld [vmem:[%s0 + $0xe4] sm:$0xf]
  %v66 = vld [vmem:[%s0 + $0xe8] sm:$0xf]
  %v67 = vld [vmem:[%s0 + $0xec] sm:$0xf]
  %v68 = vld [vmem:[%s0 + $0xf0] sm:$0xf]
  %v69 = vld [vmem:[%s0 + $0xf4] sm:$0xf]
  %v70 = vld [vmem:[%s0 + $0xf8] sm:$0xf]
  %v71 = vld [vmem:[%s0 + $0xfc] sm:$0xf]
  %v72 = vunpack.c.l.bf16 %v8
  %v73 = vunpack.c.l.bf16 %v9
  %v74 = vunpack.c.l.bf16 %v10
  %v75 = vunpack.c.l.bf16 %v11
  %v76 = vunpack.c.l.bf16 %v12
  %v77 = vunpack.c.l.bf16 %v13
  %v78 = vunpack.c.l.bf16 %v14
  %v79 = vunpack.c.l.bf16 %v15
  %v80 = vunpack.c.l.bf16 %v16
  %v81 = vunpack.c.l.bf16 %v17
  %v82 = vunpack.c.l.bf16 %v18
  %v83 = vunpack.c.l.bf16 %v19
  %v84 = vunpack.c.l.bf16 %v20
  %v85 = vunpack.c.l.bf16 %v21
  %v86 = vunpack.c.l.bf16 %v22
  %v87 = vunpack.c.l.bf16 %v23
  %v88 = vunpack.c.l.bf16 %v24
  %v89 = vunpack.c.l.bf16 %v25
  %v90 = vunpack.c.l.bf16 %v26
  %v91 = vunpack.c.l.bf16 %v27
  %v92 = vunpack.c.l.bf16 %v28
  %v93 = vunpack.c.l.bf16 %v29
  %v94 = vunpack.c.l.bf16 %v30
  %v95 = vunpack.c.l.bf16 %v31
  %v96 = vunpack.c.l.bf16 %v32
  %v97 = vunpack.c.l.bf16 %v33
  %v98 = vunpack.c.l.bf16 %v34
  %v99 = vunpack.c.l.bf16 %v35
  %v100 = vunpack.c.l.bf16 %v36
  %v101 = vunpack.c.l.bf16 %v37
  %v102 = vunpack.c.l.bf16 %v38
  %v103 = vunpack.c.l.bf16 %v39
  %v104 = vunpack.c.l.bf16 %v40
  %v105 = vunpack.c.l.bf16 %v41
  %v106 = vunpack.c.l.bf16 %v42
  %v107 = vunpack.c.l.bf16 %v43
  %v108 = vunpack.c.l.bf16 %v44
  %v109 = vunpack.c.l.bf16 %v45
  %v110 = vunpack.c.l.bf16 %v46
  %v111 = vunpack.c.l.bf16 %v47
  %v112 = vunpack.c.l.bf16 %v48
  %v113 = vunpack.c.l.bf16 %v49
  %v114 = vunpack.c.l.bf16 %v50
  %v115 = vunpack.c.l.bf16 %v51
  %v116 = vunpack.c.l.bf16 %v52
  %v117 = vunpack.c.l.bf16 %v53
  %v118 = vunpack.c.l.bf16 %v54
  %v119 = vunpack.c.l.bf16 %v55
  %v120 = vunpack.c.l.bf16 %v56
  %v121 = vunpack.c.l.bf16 %v57
  %v122 = vunpack.c.l.bf16 %v58
  %v123 = vunpack.c.l.bf16 %v59
  %v124 = vunpack.c.l.bf16 %v60
  %v125 = vunpack.c.l.bf16 %v61
  %v126 = vunpack.c.l.bf16 %v62
  %v127 = vunpack.c.l.bf16 %v63
  %v128 = vunpack.c.l.bf16 %v64
  %v129 = vunpack.c.l.bf16 %v65
  %v130 = vunpack.c.l.bf16 %v66
  %v131 = vunpack.c.l.bf16 %v67
  %v132 = vunpack.c.l.bf16 %v68
  %v133 = vunpack.c.l.bf16 %v69
  %v134 = vunpack.c.l.bf16 %v70
  %v135 = vunpack.c.l.bf16 %v71
  %vm136 = vcmask 31744
  %v137 = vsel %vm136, %v72, 0.0
  %v138 = vsel %vm136, %v73, 0.0
  %v139 = vadd.f32 %v137, %v138
  %v140 = vsel %vm136, %v74, 0.0
  %v141 = vadd.f32 %v139, %v140
  %v142 = vsel %vm136, %v75, 0.0
  %v143 = vadd.f32 %v141, %v142
  %v144 = vsel %vm136, %v76, 0.0
  %v145 = vadd.f32 %v143, %v144
  %v146 = vsel %vm136, %v77, 0.0
  %v147 = vadd.f32 %v145, %v146
  %v148 = vsel %vm136, %v78, 0.0
  %v149 = vadd.f32 %v147, %v148
  %v150 = vsel %vm136, %v79, 0.0
  %v151 = vadd.f32 %v149, %v150
  %v152 = vsel %vm136, %v80, 0.0
  %v153 = vadd.f32 %v151, %v152
  %v154 = vsel %vm136, %v81, 0.0
  %v155 = vadd.f32 %v153, %v154
  %v156 = vsel %vm136, %v82, 0.0
  %v157 = vadd.f32 %v155, %v156
  %v158 = vsel %vm136, %v83, 0.0
  %v159 = vadd.f32 %v157, %v158
  %v160 = vsel %vm136, %v84, 0.0
  %v161 = vadd.f32 %v159, %v160
  %v162 = vsel %vm136, %v85, 0.0
  %v163 = vadd.f32 %v161, %v162
  %v164 = vsel %vm136, %v86, 0.0
  %v165 = vadd.f32 %v163, %v164
  %v166 = vsel %vm136, %v87, 0.0
  %v167 = vadd.f32 %v165, %v166
  %v168 = vsel %vm136, %v88, 0.0
  %v169 = vadd.f32 %v167, %v168
  %v170 = vsel %vm136, %v89, 0.0
  %v171 = vadd.f32 %v169, %v170
  %v172 = vsel %vm136, %v90, 0.0
  %v173 = vadd.f32 %v171, %v172
  %v174 = vsel %vm136, %v91, 0.0
  %v175 = vadd.f32 %v173, %v174
  %v176 = vsel %vm136, %v92, 0.0
  %v177 = vadd.f32 %v175, %v176
  %v178 = vsel %vm136, %v93, 0.0
  %v179 = vadd.f32 %v177, %v178
  %v180 = vsel %vm136, %v94, 0.0
  %v181 = vadd.f32 %v179, %v180
  %v182 = vsel %vm136, %v95, 0.0
  %v183 = vadd.f32 %v181, %v182
  %v184 = vsel %vm136, %v96, 0.0
  %v185 = vadd.f32 %v183, %v184
  %v186 = vsel %vm136, %v97, 0.0
  %v187 = vadd.f32 %v185, %v186
  %v188 = vsel %vm136, %v98, 0.0
  %v189 = vadd.f32 %v187, %v188
  %v190 = vsel %vm136, %v99, 0.0
  %v191 = vadd.f32 %v189, %v190
  %v192 = vsel %vm136, %v100, 0.0
  %v193 = vadd.f32 %v191, %v192
  %v194 = vsel %vm136, %v101, 0.0
  %v195 = vadd.f32 %v193, %v194
  %v196 = vsel %vm136, %v102, 0.0
  %v197 = vadd.f32 %v195, %v196
  %v198 = vsel %vm136, %v103, 0.0
  %v199 = vadd.f32 %v197, %v198
  %v200 = vsel %vm136, %v104, 0.0
  %v201 = vadd.f32 %v199, %v200
  %v202 = vsel %vm136, %v105, 0.0
  %v203 = vadd.f32 %v201, %v202
  %v204 = vsel %vm136, %v106, 0.0
  %v205 = vadd.f32 %v203, %v204
  %v206 = vsel %vm136, %v107, 0.0
  %v207 = vadd.f32 %v205, %v206
  %v208 = vsel %vm136, %v108, 0.0
  %v209 = vadd.f32 %v207, %v208
  %v210 = vsel %vm136, %v109, 0.0
  %v211 = vadd.f32 %v209, %v210
  %v212 = vsel %vm136, %v110, 0.0
  %v213 = vadd.f32 %v211, %v212
  %v214 = vsel %vm136, %v111, 0.0
  %v215 = vadd.f32 %v213, %v214
  %v216 = vsel %vm136, %v112, 0.0
  %v217 = vadd.f32 %v215, %v216
  %v218 = vsel %vm136, %v113, 0.0
  %v219 = vadd.f32 %v217, %v218
  %v220 = vsel %vm136, %v114, 0.0
  %v221 = vadd.f32 %v219, %v220
  %v222 = vsel %vm136, %v115, 0.0
  %v223 = vadd.f32 %v221, %v222
  %v224 = vsel %vm136, %v116, 0.0
  %v225 = vadd.f32 %v223, %v224
  %v226 = vsel %vm136, %v117, 0.0
  %v227 = vadd.f32 %v225, %v226
  %v228 = vsel %vm136, %v118, 0.0
  %v229 = vadd.f32 %v227, %v228
  %v230 = vsel %vm136, %v119, 0.0
  %v231 = vadd.f32 %v229, %v230
  %v232 = vsel %vm136, %v120, 0.0
  %v233 = vadd.f32 %v231, %v232
  %v234 = vsel %vm136, %v121, 0.0
  %v235 = vadd.f32 %v233, %v234
  %v236 = vsel %vm136, %v122, 0.0
  %v237 = vadd.f32 %v235, %v236
  %v238 = vsel %vm136, %v123, 0.0
  %v239 = vadd.f32 %v237, %v238
  %v240 = vsel %vm136, %v124, 0.0
  %v241 = vadd.f32 %v239, %v240
  %v242 = vsel %vm136, %v125, 0.0
  %v243 = vadd.f32 %v241, %v242
  %v244 = vsel %vm136, %v126, 0.0
  %v245 = vadd.f32 %v243, %v244
  %v246 = vsel %vm136, %v127, 0.0
  %v247 = vadd.f32 %v245, %v246
  %v248 = vsel %vm136, %v128, 0.0
  %v249 = vadd.f32 %v247, %v248
  %v250 = vsel %vm136, %v129, 0.0
  %v251 = vadd.f32 %v249, %v250
  %v252 = vsel %vm136, %v130, 0.0
  %v253 = vadd.f32 %v251, %v252
  %v254 = vsel %vm136, %v131, 0.0
  %v255 = vadd.f32 %v253, %v254
  %v256 = vsel %vm136, %v132, 0.0
  %v257 = vadd.f32 %v255, %v256
  %v258 = vsel %vm136, %v133, 0.0
  %v259 = vadd.f32 %v257, %v258
  %v260 = vsel %vm136, %v134, 0.0
  %v261 = vadd.f32 %v259, %v260
  %v262 = vsel %vm136, %v135, 0.0
  %v263 = vadd.f32 %v261, %v262
  %v264 = vrot.slane %v263, 4
  %v265 = vadd.f32 %v263, %v264
  %v266 = vrot.slane %v265, 2
  %v267 = vadd.f32 %v265, %v266
  %v268 = vrot.slane %v267, 1
  %v269 = vadd.f32 %v267, %v268
  %vm270 = vcmask 24576
  %271 = vst.msk [vmem:[%s1] sm:$0x1] %vm270, %v269
  %v272 = vmul.f32 %v72, %v72
  %v273 = vmul.f32 %v73, %v73
  %v274 = vmul.f32 %v74, %v74
  %v275 = vmul.f32 %v75, %v75
  %v276 = vmul.f32 %v76, %v76
  %v277 = vmul.f32 %v77, %v77
  %v278 = vmul.f32 %v78, %v78
  %v279 = vmul.f32 %v79, %v79
  %v280 = vmul.f32 %v80, %v80
  %v281 = vmul.f32 %v81, %v81
  %v282 = vmul.f32 %v82, %v82
  %v283 = vmul.f32 %v83, %v83
  %v284 = vmul.f32 %v84, %v84
  %v285 = vmul.f32 %v85, %v85
  %v286 = vmul.f32 %v86, %v86
  %v287 = vmul.f32 %v87, %v87
  %v288 = vmul.f32 %v88, %v88
  %v289 = vmul.f32 %v89, %v89
  %v290 = vmul.f32 %v90, %v90
  %v291 = vmul.f32 %v91, %v91
  %v292 = vmul.f32 %v92, %v92
  %v293 = vmul.f32 %v93, %v93
  %v294 = vmul.f32 %v94, %v94
  %v295 = vmul.f32 %v95, %v95
  %v296 = vmul.f32 %v96, %v96
  %v297 = vmul.f32 %v97, %v97
  %v298 = vmul.f32 %v98, %v98
  %v299 = vmul.f32 %v99, %v99
  %v300 = vmul.f32 %v100, %v100
  %v301 = vmul.f32 %v101, %v101
  %v302 = vmul.f32 %v102, %v102
  %v303 = vmul.f32 %v103, %v103
  %v304 = vmul.f32 %v104, %v104
  %v305 = vmul.f32 %v105, %v105
  %v306 = vmul.f32 %v106, %v106
  %v307 = vmul.f32 %v107, %v107
  %v308 = vmul.f32 %v108, %v108
  %v309 = vmul.f32 %v109, %v109
  %v310 = vmul.f32 %v110, %v110
  %v311 = vmul.f32 %v111, %v111
  %v312 = vmul.f32 %v112, %v112
  %v313 = vmul.f32 %v113, %v113
  %v314 = vmul.f32 %v114, %v114
  %v315 = vmul.f32 %v115, %v115
  %v316 = vmul.f32 %v116, %v116
  %v317 = vmul.f32 %v117, %v117
  %v318 = vmul.f32 %v118, %v118
  %v319 = vmul.f32 %v119, %v119
  %v320 = vmul.f32 %v120, %v120
  %v321 = vmul.f32 %v121, %v121
  %v322 = vmul.f32 %v122, %v122
  %v323 = vmul.f32 %v123, %v123
  %v324 = vmul.f32 %v124, %v124
  %v325 = vmul.f32 %v125, %v125
  %v326 = vmul.f32 %v126, %v126
  %v327 = vmul.f32 %v127, %v127
  %v328 = vmul.f32 %v128, %v128
  %v329 = vmul.f32 %v129, %v129
  %v330 = vmul.f32 %v130, %v130
  %v331 = vmul.f32 %v131, %v131
  %v332 = vmul.f32 %v132, %v132
  %v333 = vmul.f32 %v133, %v133
  %v334 = vmul.f32 %v134, %v134
  %v335 = vmul.f32 %v135, %v135
  %v336 = vsel %vm136, %v272, 0.0
  %v337 = vsel %vm136, %v273, 0.0
  %v338 = vadd.f32 %v336, %v337
  %v339 = vsel %vm136, %v274, 0.0
  %v340 = vadd.f32 %v338, %v339
  %v341 = vsel %vm136, %v275, 0.0
  %v342 = vadd.f32 %v340, %v341
  %v343 = vsel %vm136, %v276, 0.0
  %v344 = vadd.f32 %v342, %v343
  %v345 = vsel %vm136, %v277, 0.0
  %v346 = vadd.f32 %v344, %v345
  %v347 = vsel %vm136, %v278, 0.0
  %v348 = vadd.f32 %v346, %v347
  %v349 = vsel %vm136, %v279, 0.0
  %v350 = vadd.f32 %v348, %v349
  %v351 = vsel %vm136, %v280, 0.0
  %v352 = vadd.f32 %v350, %v351
  %v353 = vsel %vm136, %v281, 0.0
  %v354 = vadd.f32 %v352, %v353
  %v355 = vsel %vm136, %v282, 0.0
  %v356 = vadd.f32 %v354, %v355
  %v357 = vsel %vm136, %v283, 0.0
  %v358 = vadd.f32 %v356, %v357
  %v359 = vsel %vm136, %v284, 0.0
  %v360 = vadd.f32 %v358, %v359
  %v361 = vsel %vm136, %v285, 0.0
  %v362 = vadd.f32 %v360, %v361
  %v363 = vsel %vm136, %v286, 0.0
  %v364 = vadd.f32 %v362, %v363
  %v365 = vsel %vm136, %v287, 0.0
  %v366 = vadd.f32 %v364, %v365
  %v367 = vsel %vm136, %v288, 0.0
  %v368 = vadd.f32 %v366, %v367
  %v369 = vsel %vm136, %v289, 0.0
  %v370 = vadd.f32 %v368, %v369
  %v371 = vsel %vm136, %v290, 0.0
  %v372 = vadd.f32 %v370, %v371
  %v373 = vsel %vm136, %v291, 0.0
  %v374 = vadd.f32 %v372, %v373
  %v375 = vsel %vm136, %v292, 0.0
  %v376 = vadd.f32 %v374, %v375
  %v377 = vsel %vm136, %v293, 0.0
  %v378 = vadd.f32 %v376, %v377
  %v379 = vsel %vm136, %v294, 0.0
  %v380 = vadd.f32 %v378, %v379
  %v381 = vsel %vm136, %v295, 0.0
  %v382 = vadd.f32 %v380, %v381
  %v383 = vsel %vm136, %v296, 0.0
  %v384 = vadd.f32 %v382, %v383
  %v385 = vsel %vm136, %v297, 0.0
  %v386 = vadd.f32 %v384, %v385
  %v387 = vsel %vm136, %v298, 0.0
  %v388 = vadd.f32 %v386, %v387
  %v389 = vsel %vm136, %v299, 0.0
  %v390 = vadd.f32 %v388, %v389
  %v391 = vsel %vm136, %v300, 0.0
  %v392 = vadd.f32 %v390, %v391
  %v393 = vsel %vm136, %v301, 0.0
  %v394 = vadd.f32 %v392, %v393
  %v395 = vsel %vm136, %v302, 0.0
  %v396 = vadd.f32 %v394, %v395
  %v397 = vsel %vm136, %v303, 0.0
  %v398 = vadd.f32 %v396, %v397
  %v399 = vsel %vm136, %v304, 0.0
  %v400 = vadd.f32 %v398, %v399
  %v401 = vsel %vm136, %v305, 0.0
  %v402 = vadd.f32 %v400, %v401
  %v403 = vsel %vm136, %v306, 0.0
  %v404 = vadd.f32 %v402, %v403
  %v405 = vsel %vm136, %v307, 0.0
  %v406 = vadd.f32 %v404, %v405
  %v407 = vsel %vm136, %v308, 0.0
  %v408 = vadd.f32 %v406, %v407
  %v409 = vsel %vm136, %v309, 0.0
  %v410 = vadd.f32 %v408, %v409
  %v411 = vsel %vm136, %v310, 0.0
  %v412 = vadd.f32 %v410, %v411
  %v413 = vsel %vm136, %v311, 0.0
  %v414 = vadd.f32 %v412, %v413
  %v415 = vsel %vm136, %v312, 0.0
  %v416 = vadd.f32 %v414, %v415
  %v417 = vsel %vm136, %v313, 0.0
  %v418 = vadd.f32 %v416, %v417
  %v419 = vsel %vm136, %v314, 0.0
  %v420 = vadd.f32 %v418, %v419
  %v421 = vsel %vm136, %v315, 0.0
  %v422 = vadd.f32 %v420, %v421
  %v423 = vsel %vm136, %v316, 0.0
  %v424 = vadd.f32 %v422, %v423
  %v425 = vsel %vm136, %v317, 0.0
  %v426 = vadd.f32 %v424, %v425
  %v427 = vsel %vm136, %v318, 0.0
  %v428 = vadd.f32 %v426, %v427
  %v429 = vsel %vm136, %v319, 0.0
  %v430 = vadd.f32 %v428, %v429
  %v431 = vsel %vm136, %v320, 0.0
  %v432 = vadd.f32 %v430, %v431
  %v433 = vsel %vm136, %v321, 0.0
  %v434 = vadd.f32 %v432, %v433
  %v435 = vsel %vm136, %v322, 0.0
  %v436 = vadd.f32 %v434, %v435
  %v437 = vsel %vm136, %v323, 0.0
  %v438 = vadd.f32 %v436, %v437
  %v439 = vsel %vm136, %v324, 0.0
  %v440 = vadd.f32 %v438, %v439
  %v441 = vsel %vm136, %v325, 0.0
  %v442 = vadd.f32 %v440, %v441
  %v443 = vsel %vm136, %v326, 0.0
  %v444 = vadd.f32 %v442, %v443
  %v445 = vsel %vm136, %v327, 0.0
  %v446 = vadd.f32 %v444, %v445
  %v447 = vsel %vm136, %v328, 0.0
  %v448 = vadd.f32 %v446, %v447
  %v449 = vsel %vm136, %v329, 0.0
  %v450 = vadd.f32 %v448, %v449
  %v451 = vsel %vm136, %v330, 0.0
  %v452 = vadd.f32 %v450, %v451
  %v453 = vsel %vm136, %v331, 0.0
  %v454 = vadd.f32 %v452, %v453
  %v455 = vsel %vm136, %v332, 0.0
  %v456 = vadd.f32 %v454, %v455
  %v457 = vsel %vm136, %v333, 0.0
  %v458 = vadd.f32 %v456, %v457
  %v459 = vsel %vm136, %v334, 0.0
  %v460 = vadd.f32 %v458, %v459
  %v461 = vsel %vm136, %v335, 0.0
  %v462 = vadd.f32 %v460, %v461
  %v463 = vrot.slane %v462, 4
  %v464 = vadd.f32 %v462, %v463
  %v465 = vrot.slane %v464, 2
  %v466 = vadd.f32 %v464, %v465
  %v467 = vrot.slane %v466, 1
  %v468 = vadd.f32 %v466, %v467
  %469 = vst.msk [vmem:[%s1 + $0x1] sm:$0x1] %vm270, %v468
  %vm470 = vcmask 29696
  %471 = vst.msk [vmem:[%s1 + $0x2] sm:$0x3f] %vm470, 0.0
  // Predicated region
  $region6: #{tpu_custom_call.1} parent=0 // pred_check
    _
  $region7: #{tpu_custom_call.1} parent=0 // pred_check_branch
    %473 = sbr.rel (0) target = $region9
  $region8: #{tpu_custom_call.1} parent=0 // pred_region
    _
  $region9: #{tpu_custom_call.1} parent=0 // pred_fallthru
    _
  // Predicated region
  $region10: #{tpu_custom_call.1} parent=0 // pred_check
    _
  $region11: #{tpu_custom_call.1} parent=0 // pred_check_branch
    %475 = sbr.rel (0) target = $region13
  $region12: #{tpu_custom_call.1} parent=0 // pred_region
    _
  $region13: #{tpu_custom_call.1} parent=0 // pred_fallthru
    _

</llo_original>
